<compile_context>
chip_gen: v7x
topology: tpu7x:2x2x1
jax: 0.10.0
libtpu: 0.0.40
codegen_flags: <defaults>
</compile_context>

<pallas_src>
import jax
import jax.numpy as jnp
from jax.experimental import pallas as pl
from jax.experimental.pallas import tpu as pltpu


def _round_up(x, m):
    return (x + m - 1) // m * m


def adaline_kernel(b_ref, wsel_ref, x_ref, o_ref):
    # x_ref:    (R, 128) f32 VMEM tile. Each 128-lane row holds G = 128 // F
    #           consecutive samples with their F features interleaved
    #           (i.e. the natural row-major packing of the (N, F) input).
    # wsel_ref: (128, G) f32 VMEM constant: wsel[l, j] = w[l % F]*(l // F == j).
    # b_ref:    (1,) f32 SMEM bias.
    # o_ref:    (R, G) f32: sample (row*G + j) of this tile lands at [row, j].
    #
    # One full-K MXU matmul per tile = multiply + per-sample reduce +
    # lane compaction, all on an otherwise idle unit (kernel is HBM-bound).
    acc = jnp.dot(x_ref[...], wsel_ref[...], preferred_element_type=jnp.float32)
    o_ref[...] = acc + b_ref[0]


def adaline_forward(x, weight, bias, *, max_rows_per_tile=8192):
    """ADALine forward: (X @ w + b).view(-1).

    x: (N, F); weight: (F,), (F,1) or (1,F); bias: scalar-like. Returns (N,) f32.
    """
    x = jnp.asarray(x, jnp.float32)
    n, f = x.shape
    w = jnp.asarray(weight, jnp.float32).reshape(f)
    b = jnp.asarray(bias, jnp.float32).reshape(1)

    # Pack G = 128 // F consecutive samples per 128-lane row.
    # TODO(synk): num_features not dividing 128 would need feature padding.
    assert 128 % f == 0, "kernel packs 128 // num_features samples per lane row"
    g = 128 // f

    n_pad = _round_up(n, g)
    if n_pad != n:
        # Only the ragged-N case pays a pad copy; aligned N is fully zero-copy.
        x = jnp.pad(x, ((0, n_pad - n), (0, 0)))
    rows = n_pad // g
    xr = x.reshape(rows, f * g)  # (rows, 128): free row-major re-view, no HBM copy

    # Rows per grid step: multiple of 8 sublanes (or the full dim when tiny).
    # Default 8192 rows = 256K samples/step -> ~5 MiB DMA/step (>> 0.35 us
    # per-step overhead) and ~16 MiB double-buffered VMEM (fits v5e/v6e/v7x).
    r = min(max_rows_per_tile, rows)
    if r >= 8:
        r = _round_up(r, 8)
    grid = (pl.cdiv(rows, r),)

    # Deinterleaving weight matrix: wsel[l, j] = w[l % F] if l // F == j else 0.
    lane = jnp.arange(128)
    wsel = jnp.where((lane[:, None] // f) == jnp.arange(g)[None, :],
                     w[lane % f][:, None], 0.0).astype(jnp.float32)

    out = pl.pallas_call(
        adaline_kernel,
        out_shape=jax.ShapeDtypeStruct((rows, g), jnp.float32),
        grid_spec=pltpu.PrefetchScalarGridSpec(
            num_scalar_prefetch=0,
            grid=grid,
            in_specs=[
                pl.BlockSpec(memory_space=pltpu.MemorySpace.SMEM),  # bias (1,)
                pl.BlockSpec((128, g), lambda i: (0, 0)),           # wsel (const)
                pl.BlockSpec((r, f * g), lambda i: (i, 0)),         # X rows (lane-dense)
            ],
            out_specs=pl.BlockSpec((r, g), lambda i: (i, 0)),
        ),
        compiler_params=pltpu.CompilerParams(
            dimension_semantics=("parallel",),      # independent batch tiles (2 TCs on v7x)
            vmem_limit_bytes=48 * 1024 * 1024,       # allow the big double-buffered tiles
        ),
        cost_estimate=pl.CostEstimate(
            flops=2 * f * n_pad,
            bytes_accessed=4 * (rows * 128 + rows * g + 128 * g) + 4,
            transcendentals=0,
        ),
    )(b, wsel, xr)

    # .view(-1) equivalent: free re-view; the [:n] slice is an identity (no
    # extra HBM pass) whenever N is already a multiple of G.
    return out.reshape(-1)[:n]


if __name__ == "__main__":
    num_features = 4

    key = jax.random.PRNGKey(0)
    k0, k1, k2, k3 = jax.random.split(key, 4)

    # Case 1: module as specified -- Linear(4, 1) with zero-initialised params.
    batch = 8
    x = jax.random.normal(k0, (batch, num_features), dtype=jnp.float32)
    weight = jnp.zeros((num_features,), dtype=jnp.float32)
    bias = jnp.zeros((1,), dtype=jnp.float32)
    y = jax.block_until_ready(adaline_forward(x, weight, bias))
    y_ref = (x @ weight.reshape(num_features, 1) + bias).reshape(-1)
    assert y.shape == (batch,), y.shape
    assert jnp.allclose(y, y_ref, atol=1e-6), (y, y_ref)

    # Case 2: non-zero params + ragged batch (exercises the padded tail path).
    n2 = 300
    x2 = jax.random.normal(k1, (n2, num_features), dtype=jnp.float32)
    w2 = jax.random.normal(k2, (num_features,), dtype=jnp.float32)
    b2 = jax.random.normal(k3, (1,), dtype=jnp.float32)
    y2 = jax.block_until_ready(adaline_forward(x2, w2, b2))
    y2_ref = (x2 @ w2.reshape(num_features, 1) + b2).reshape(-1)
    assert y2.shape == (n2,), y2.shape
    assert jnp.allclose(y2, y2_ref, atol=1e-5), (y2, y2_ref)

    # Case 3: aligned batch, multi-step grid (zero-copy input, pipelined DMAs).
    n3 = 4096
    x3 = jax.random.normal(k1, (n3, num_features), dtype=jnp.float32)
    y3 = jax.block_until_ready(adaline_forward(x3, w2, b2, max_rows_per_tile=32))
    y3_ref = (x3 @ w2.reshape(num_features, 1) + b2).reshape(-1)
    assert y3.shape == (n3,), y3.shape
    assert jnp.allclose(y3, y3_ref, atol=1e-5), (y3, y3_ref)

    print("KERNEL_OK")
</pallas_src>

<mosaic_0001>
module attributes {stable_mosaic.version = 11 : i64} {
  func.func @adaline_kernel(%arg0: i32, %arg1: memref<1xf32, #tpu.memory_space<smem>>, %arg2: memref<128x32xf32, #tpu.memory_space<vmem>>, %arg3: memref<1x128xf32, #tpu.memory_space<vmem>>, %arg4: memref<1x32xf32, #tpu.memory_space<vmem>>) attributes {dimension_semantics = [#tpu.dimension_semantics<parallel>], iteration_bounds = array<i64: 1>, scalar_prefetch = 0 : i64, scratch_operands = 0 : i64, tpu.core_type = #tpu.core_type<tc>, window_params = [{transform_indices = @transform_0, window_bounds = array<i64: 1>}, {pipeline_mode = #tpu.pipeline_mode<synchronous>, transform_indices = @transform_1, window_bounds = array<i64: 128, 32>}, {transform_indices = @transform_2, window_bounds = array<i64: 1, 128>}, {transform_indices = @transform_3, window_bounds = array<i64: 1, 32>}]} {
    %c0 = arith.constant 0 : index
    %c0_0 = arith.constant 0 : index
    %0 = vector.load %arg3[%c0, %c0_0] : memref<1x128xf32, #tpu.memory_space<vmem>>, vector<1x128xf32>
    %c0_1 = arith.constant 0 : index
    %c0_2 = arith.constant 0 : index
    %1 = vector.load %arg2[%c0_1, %c0_2] : memref<128x32xf32, #tpu.memory_space<vmem>>, vector<128x32xf32>
    %cst = arith.constant dense<0.000000e+00> : vector<1x32xf32>
    %2 = tpu.matmul %0, %1, %cst {dimension_numbers = #tpu.dot_dimension_numbers<[1], [0], [0], [1], [0, 0, 1, 1], [], []>} : vector<1x128xf32>, vector<128x32xf32>, vector<1x32xf32> -> vector<1x32xf32>
    %c0_3 = arith.constant 0 : index
    %3 = memref.load %arg1[%c0_3] : memref<1xf32, #tpu.memory_space<smem>>
    %4 = vector.broadcast %3 : f32 to vector<1x32xf32>
    %5 = arith.addf %2, %4 : vector<1x32xf32>
    %c0_4 = arith.constant 0 : index
    %c0_5 = arith.constant 0 : index
    %6 = vector.load %arg4[%c0_4, %c0_5] : memref<1x32xf32, #tpu.memory_space<vmem>>, vector<1x32xf32>
    tpu.vector_store %arg4[%c0_4, %c0_5], %5 {strides = array<i32>} : memref<1x32xf32, #tpu.memory_space<vmem>>, vector<1x32xf32>,
    return
  }
  func.func @transform_0(%arg0: i32) -> i32 {
    %c0_i32 = arith.constant 0 : i32
    %c0_i32_0 = arith.constant 0 : i32
    return %c0_i32 : i32
  }
  func.func @transform_1(%arg0: i32) -> (i32, i32) {
    %c0_i32 = arith.constant 0 : i32
    %c0_i32_0 = arith.constant 0 : i32
    %c0_i32_1 = arith.constant 0 : i32
    return %c0_i32, %c0_i32_0 : i32, i32
  }
  func.func @transform_2(%arg0: i32) -> (i32, i32) {
    %c0_i32 = arith.constant 0 : i32
    %c0_i32_0 = arith.constant 0 : i32
    return %arg0, %c0_i32 : i32, i32
  }
  func.func @transform_3(%arg0: i32) -> (i32, i32) {
    %c0_i32 = arith.constant 0 : i32
    %c0_i32_0 = arith.constant 0 : i32
    return %arg0, %c0_i32 : i32, i32
  }
}

</mosaic_0001>

<llo_original>
// kernel: tpu_custom_call.1
$region0: #{tpu_custom_call.1}
  #allocation0 [shape = 'u32[]', space=smem, size = 0x4, offset = 0x4, fixed_abs, tag = 'smem constant byte address 0x4 - core index']
  #allocation1 [shape = 'u32[144,128]{1,0:T(1,128)}', space=vmem, size = 0x12000, scoped, tag = 'internal scratch']
  #allocation2 [shape = 'f32[1]{0:T(128)S(6)}', space=smem, size = 0x200, scoped, tag = 'scoped memory for tpu_custom_call.1']
  %s0 = inlined_call_operand.<no memory space> [shape: f32[1], index: 0, kind: input, shape index: {}]
  %s1 = inlined_call_operand.vmem [shape: f32[128,32], index: 1, kind: input, shape index: {}]
  %s2 = inlined_call_operand.vmem [shape: f32[1,128], index: 2, kind: input, shape index: {}]
  %s3 = inlined_call_operand.hbm [shape: f32[1,32], index: 3, kind: output, shape index: {}]
  %s4 = sld [smem:[#allocation0]]
  $region22: #{tpu_custom_call.1} parent=0
    _
  %s6 = ssub.s32 1, %s4
  %s7 = scalar_select 0, %s6, %s4
  %8 = sst [smem:[#allocation2]] %s0
  $region1: #{tpu_custom_call.1} parent=0
    #allocation3 [shape = 'u8[512]{0}', space=vmem, size = 0x400, scoped, tag = 'output window, operand 0, single buffered']
    #allocation4 [shape = 's32[1]{0}', space=sflag, size = 0x4, scoped, tag = 'scoped memory for tpu_custom_call.1']
    %9 = vsyncpa [#allocation4], 0
    // Predicated region
    $region2: #{tpu_custom_call.1} parent=1 // pred_check
      _
    $region3: #{tpu_custom_call.1} parent=1 // pred_check_branch
      %11 = sbr.rel (0) target = $region5
    $region4: #{tpu_custom_call.1} parent=1 // pred_region
      _
    $region5: #{tpu_custom_call.1} parent=1 // pred_fallthru
      _
    // Predicated region
    $region6: #{tpu_custom_call.1} parent=1 // pred_check
      _
    $region7: #{tpu_custom_call.1} parent=1 // pred_check_branch
      %13 = sbr.rel (0) target = $region9
    $region8: #{tpu_custom_call.1} parent=1 // pred_region
      _
    $region9: #{tpu_custom_call.1} parent=1 // pred_fallthru
      _
    // Predicated region
    $region10: #{tpu_custom_call.1} parent=1 // pred_check
      _
    $region11: #{tpu_custom_call.1} parent=1 // pred_check_branch
      %15 = sbr.rel (0) target = $region13
    $region12: #{tpu_custom_call.1} parent=1 // pred_region
      _
    $region13: #{tpu_custom_call.1} parent=1 // pred_fallthru
      _
    %v16 = vld [vmem:[%s2] sm:$0x1]
    %v17 = vld [vmem:[%s1] sm:$0xff]
    %v18 = vld [vmem:[%s1 + $0x8] sm:$0xff]
    %v19 = vld [vmem:[%s1 + $0x10] sm:$0xff]
    %v20 = vld [vmem:[%s1 + $0x18] sm:$0xff]
    %v21 = vld [vmem:[%s1 + $0x20] sm:$0xff]
    %v22 = vld [vmem:[%s1 + $0x28] sm:$0xff]
    %v23 = vld [vmem:[%s1 + $0x30] sm:$0xff]
    %v24 = vld [vmem:[%s1 + $0x38] sm:$0xff]
    %v25 = vld [vmem:[%s1 + $0x40] sm:$0xff]
    %v26 = vld [vmem:[%s1 + $0x48] sm:$0xff]
    %v27 = vld [vmem:[%s1 + $0x50] sm:$0xff]
    %v28 = vld [vmem:[%s1 + $0x58] sm:$0xff]
    %v29 = vld [vmem:[%s1 + $0x60] sm:$0xff]
    %v30 = vld [vmem:[%s1 + $0x68] sm:$0xff]
    %v31 = vld [vmem:[%s1 + $0x70] sm:$0xff]
    %v32 = vld [vmem:[%s1 + $0x78] sm:$0xff]
    %s33 = sld [smem:[#allocation2]]
    %v34 = vstv %s33
    %35 = vmatprep.subr.mxu0 0.0
    %36 = vmatpush1.msra.mxu0 %v17
    %37 = vmatprep.subr.mxu0 0.0
    %38 = vmatpush1.msra.mxu0 %v18
    %39 = vmatprep.subr.mxu0 0.0
    %40 = vmatpush1.msra.mxu0 %v19
    %41 = vmatprep.subr.mxu0 0.0
    %42 = vmatpush1.msra.mxu0 %v20
    %43 = vmatprep.subr.mxu0 0.0
    %44 = vmatpush1.msra.mxu0 %v21
    %45 = vmatprep.subr.mxu0 0.0
    %46 = vmatpush1.msra.mxu0 %v22
    %47 = vmatprep.subr.mxu0 0.0
    %48 = vmatpush1.msra.mxu0 %v23
    %49 = vmatprep.subr.mxu0 0.0
    %50 = vmatpush1.msra.mxu0 %v24
    %51 = vmatprep.subr.mxu0 0.0
    %52 = vmatpush1.msra.mxu0 %v25
    %53 = vmatprep.subr.mxu0 0.0
    %54 = vmatpush1.msra.mxu0 %v26
    %55 = vmatprep.subr.mxu0 0.0
    %56 = vmatpush1.msra.mxu0 %v27
    %57 = vmatprep.subr.mxu0 0.0
    %58 = vmatpush1.msra.mxu0 %v28
    %59 = vmatprep.subr.mxu0 0.0
    %60 = vmatpush1.msra.mxu0 %v29
    %61 = vmatprep.subr.mxu0 0.0
    %62 = vmatpush1.msra.mxu0 %v30
    %63 = vmatprep.subr.mxu0 0.0
    %64 = vmatpush1.msra.mxu0 %v31
    %65 = vmatprep.subr.mxu0 0.0
    %66 = vmatpush1.msra.mxu0 %v32
    %67 = vmatprep.subr.mxu0 0.0
    %68 = vmatpush1.msra.mxu0 0.0
    %69 = vmatprep.subr.mxu0 0.0
    %70 = vmatpush1.msra.mxu0 0.0
    %71 = vmatprep.subr.mxu0 0.0
    %72 = vmatpush1.msra.mxu0 0.0
    %73 = vmatprep.subr.mxu0 0.0
    %74 = vmatpush1.msra.mxu0 0.0
    %75 = vmatprep.subr.mxu0 0.0
    %76 = vmatpush1.msra.mxu0 0.0
    %77 = vmatprep.subr.mxu0 0.0
    %78 = vmatpush1.msra.mxu0 0.0
    %79 = vmatprep.subr.mxu0 0.0
    %80 = vmatpush1.msra.mxu0 0.0
    %81 = vmatprep.subr.mxu0 0.0
    %82 = vmatpush1.msra.mxu0 0.0
    %83 = vmatprep.subr.mxu0 0.0
    %84 = vmatpush1.msra.mxu0 0.0
    %85 = vmatprep.subr.mxu0 0.0
    %86 = vmatpush1.msra.mxu0 0.0
    %87 = vmatprep.subr.mxu0 0.0
    %88 = vmatpush1.msra.mxu0 0.0
    %89 = vmatprep.subr.mxu0 0.0
    %90 = vmatpush1.msra.mxu0 0.0
    %91 = vmatprep.subr.mxu0 0.0
    %92 = vmatpush1.msra.mxu0 0.0
    %93 = vmatprep.subr.mxu0 0.0
    %94 = vmatpush1.msra.mxu0 0.0
    %95 = vmatprep.subr.mxu0 0.0
    %96 = vmatpush1.msra.mxu0 0.0
    %97 = vmatprep.subr.mxu0 0.0
    %98 = vmatpush1.msra.mxu0 0.0
    %99 = vmatprep.mubr.f32.mxu0 0.0
    %100 = vmatmul.mubr.f32.gmra.mrb[0].mxu0 %v16
    %v101 = vpop.f32.mrb[0].mxu0
    %v102 = vadd.f32 %v34, %v101
    %v103 = vpop.f32.mrb[0].mxu0
    %104 = vdwg.mxu0
    %vm105 = vcmask 253952
    %106 = vst.msk [vmem:[#allocation3] sm:$0x1] %vm105, %v102
    // Predicated region
    $region14: #{tpu_custom_call.1} parent=1 // pred_check
      _
    $region15: #{tpu_custom_call.1} parent=1 // pred_check_branch
      %108 = sbr.rel (0) target = $region17
    $region16: #{tpu_custom_call.1} parent=1 // pred_region
      %s110 = ssub.s32 16, 16
      %111 = vsyncadd [#allocation4], %s110
      %s113 = sshll.u32 [#allocation3], 4
      %s114 = int_to_ptr.vmem [resolvable:$true] %s113
      %116 = dma.vmem_to_hbm [thread:$0]  %s114, 16, %s3, [#allocation4]
    $region17: #{tpu_custom_call.1} parent=1 // pred_fallthru
      _
    // Predicated region
    $region18: #{tpu_custom_call.1} parent=1 // pred_check
      _
    $region19: #{tpu_custom_call.1} parent=1 // pred_check_branch
      %118 = sbr.rel (0) target = $region21
    $region20: #{tpu_custom_call.1} parent=1 // pred_region
      %119 = dma.done [#allocation4], 16
    $region21: #{tpu_custom_call.1} parent=1 // pred_fallthru
      _
    %120 = vsyncpa [#allocation4], 1

</llo_original>
